<compile_context>
chip_gen: v7x
topology: tpu7x:2x2x1
jax: 0.10.0
libtpu: 0.0.40
codegen_flags: <defaults>
</compile_context>

<pallas_src>
import jax
import jax.numpy as jnp
from jax.experimental import pallas as pl
from jax.experimental.pallas import tpu as pltpu

MAX_TILE_N = 1024  # rows of active voxels per grid step (cap)


def _round_up(x, m):
    return ((x + m - 1) // m) * m


# ----------------------------- Pallas kernels ------------------------------ #

def _conv_bn_relu_kernel(xg_ref, w_ref, b_ref, o_ref):
    # xg: (T, KK*Cin) bf16   w: (KK*Cin, Cout) bf16 (BN scale pre-folded)
    # b:  (1, Cout)  f32 (BN shift)               o: (T, Cout) bf16
    acc = jnp.dot(xg_ref[...], w_ref[...], preferred_element_type=jnp.float32)
    o_ref[...] = jnp.maximum(acc + b_ref[...], 0.0).astype(o_ref.dtype)


def _linear_bias_kernel(x_ref, w_ref, b_ref, o_ref):
    # Fused final 1x1 convs (block-diagonal weight across heads), f32 output.
    acc = jnp.dot(x_ref[...], w_ref[...], preferred_element_type=jnp.float32)
    o_ref[...] = acc + b_ref[...]


def _matmul_call(kernel, x, w, b, out_dtype, tile_n):
    n_pad, k = x.shape
    c_out = w.shape[1]
    return pl.pallas_call(
        kernel,
        out_shape=jax.ShapeDtypeStruct((n_pad, c_out), out_dtype),
        grid=(n_pad // tile_n,),
        in_specs=[
            pl.BlockSpec((tile_n, k), lambda i: (i, 0)),
            pl.BlockSpec((k, c_out), lambda i: (0, 0)),
            pl.BlockSpec((1, c_out), lambda i: (0, 0)),
        ],
        out_specs=pl.BlockSpec((tile_n, c_out), lambda i: (i, 0)),
        compiler_params=pltpu.CompilerParams(
            dimension_semantics=("parallel",)),
    )(x, w, b)


# ------------------------------ JAX glue ----------------------------------- #

def build_neighbor_table(indices, batch_size, spatial_shape, kernel_size):
    """Rulebook for submanifold conv: for each active voxel, the active-voxel
    index of each of the K*K spatial neighbours (-1 if inactive / OOB)."""
    H, W = spatial_shape
    n = indices.shape[0]
    p = kernel_size // 2
    grid = jnp.full((batch_size, H, W), -1, jnp.int32)
    grid = grid.at[indices[:, 0], indices[:, 1], indices[:, 2]].set(
        jnp.arange(n, dtype=jnp.int32))
    b, y, x = indices[:, 0], indices[:, 1], indices[:, 2]
    cols = []
    for dy in range(-p, p + 1):
        for dx in range(-p, p + 1):
            ny, nx = y + dy, x + dx
            valid = (ny >= 0) & (ny < H) & (nx >= 0) & (nx < W)
            idx = grid[b, jnp.clip(ny, 0, H - 1), jnp.clip(nx, 0, W - 1)]
            cols.append(jnp.where(valid, idx, -1))
    return jnp.stack(cols, axis=1)  # [N, K*K]


def gather_neighbors(feats, nbr_table):
    """[Np, C] x [Np, K*K] -> [Np, K*K*C], zeros where the neighbour is inactive."""
    g = jnp.where((nbr_table >= 0)[..., None],
                  feats[jnp.clip(nbr_table, 0), :],
                  jnp.zeros((), feats.dtype))
    return g.reshape(nbr_table.shape[0], -1)


def init_separate_head_params(key, input_channels, sep_head_dict, kernel_size,
                              init_bias=-2.19):
    """PyTorch-faithful parameter structure (f32, BN kept as gamma/beta/mean/var)."""
    kk = kernel_size * kernel_size
    params = {}
    for name, cfg in sep_head_dict.items():
        oc, num_conv = cfg['out_channels'], cfg['num_conv']
        layers = []
        for _ in range(num_conv - 1):
            key, wk = jax.random.split(key)
            fan_in = kk * input_channels
            w = jax.random.normal(wk, (fan_in, input_channels),
                                  jnp.float32) * (2.0 / fan_in) ** 0.5
            bn = dict(gamma=jnp.ones((input_channels,), jnp.float32),
                      beta=jnp.zeros((input_channels,), jnp.float32),
                      mean=jnp.zeros((input_channels,), jnp.float32),
                      var=jnp.ones((input_channels,), jnp.float32))
            layers.append(dict(w=w, bn=bn))
        key, wk = jax.random.split(key)
        w_out = jax.random.normal(wk, (input_channels, oc),
                                  jnp.float32) * (2.0 / input_channels) ** 0.5
        b_out = jnp.full((oc,), init_bias if 'hm' in name else 0.0, jnp.float32)
        params[name] = dict(conv_layers=layers, w_out=w_out, b_out=b_out)
    return params


def prepare_fused_params(params, sep_head_dict, input_channels, eps=1e-5):
    """Fold BN into bf16 conv weights, fuse first-layer weights across heads,
    and build a block-diagonal fused final-1x1 weight."""
    names = list(sep_head_dict.keys())
    C = input_channels

    def fold(layer):
        bn = layer['bn']
        scale = bn['gamma'] / jnp.sqrt(bn['var'] + eps)
        shift = bn['beta'] - bn['mean'] * scale
        w = (layer['w'] * scale[None, :]).astype(jnp.bfloat16)
        return w, shift.reshape(1, C).astype(jnp.float32)

    # Stage 0: every head's first conv reads the same gathered feats ->
    # concatenate their weights along the output-channel dim (wide MXU N).
    stage0_heads = [n for n in names if len(params[n]['conv_layers']) >= 1]
    stage0 = None
    if stage0_heads:
        ws, bs = zip(*(fold(params[n]['conv_layers'][0]) for n in stage0_heads))
        stage0 = dict(heads=stage0_heads,
                      w=jnp.concatenate(ws, axis=1),
                      b=jnp.concatenate(bs, axis=1))

    # Deeper conv layers (per head, rare in practice).
    deep = {n: [fold(l) for l in params[n]['conv_layers'][1:]] for n in names}

    # Final 1x1: block-diagonal weight over the packed per-head activations.
    oc_list = [sep_head_dict[n]['out_channels'] for n in names]
    oc_sum = sum(oc_list)
    w_fin = jnp.zeros((len(names) * C, oc_sum), jnp.float32)
    b_fin = jnp.zeros((1, oc_sum), jnp.float32)
    col = 0
    col_slices = {}
    for i, n in enumerate(names):
        oc = oc_list[i]
        w_fin = w_fin.at[i * C:(i + 1) * C, col:col + oc].set(params[n]['w_out'])
        b_fin = b_fin.at[0, col:col + oc].set(params[n]['b_out'])
        col_slices[n] = (col, oc)
        col += oc
    final = dict(w=w_fin.astype(jnp.bfloat16), b=b_fin, col_slices=col_slices)

    return dict(names=names, C=C, stage0=stage0, deep=deep, final=final)


def separate_head_forward(fused, feats, nbr_table):
    """Pallas-backed forward.  Returns {head_name: [N_active, out_ch]} (f32)."""
    names, C = fused['names'], fused['C']
    n = feats.shape[0]
    tile_n = min(MAX_TILE_N, _round_up(max(n, 1), 128))
    n_pad = _round_up(n, tile_n)

    feats_p = jnp.pad(feats, ((0, n_pad - n), (0, 0))).astype(jnp.bfloat16)
    nbr_p = jnp.pad(nbr_table, ((0, n_pad - n), (0, 0)), constant_values=-1)

    # Current activation per head ([n_pad, C] bf16); heads with num_conv == 1
    # feed feats straight into their 1x1 conv.
    cur = {name: feats_p for name in names}

    # Stage 0: one shared gather + one fused conv over all heads' first layer.
    st0 = fused['stage0']
    if st0 is not None:
        xg = gather_neighbors(feats_p, nbr_p)                 # [n_pad, KK*C] bf16
        h = _matmul_call(_conv_bn_relu_kernel, xg, st0['w'], st0['b'],
                         jnp.bfloat16, tile_n)                # [n_pad, nheads*C]
        for i, name in enumerate(st0['heads']):
            cur[name] = h[:, i * C:(i + 1) * C]

    # Deeper conv layers (per head).
    for name in names:
        for (w, b) in fused['deep'][name]:
            xg = gather_neighbors(cur[name], nbr_p)
            cur[name] = _matmul_call(_conv_bn_relu_kernel, xg, w, b,
                                     jnp.bfloat16, tile_n)

    # Fused final 1x1 over the packed per-head activations (block-diag weight).
    x_fin = jnp.concatenate([cur[name] for name in names], axis=1)
    out = _matmul_call(_linear_bias_kernel, x_fin, fused['final']['w'],
                       fused['final']['b'], jnp.float32, tile_n)

    ret = {}
    for name in names:
        col, oc = fused['final']['col_slices'][name]
        ret[name] = out[:n, col:col + oc]
    return ret


def separate_head_reference(params, sep_head_dict, feats, nbr_table, eps=1e-5):
    """Unfused per-head reference using the same bf16-input / f32-accumulate
    matmul math (validates both the Pallas kernels and the head fusion)."""
    ret = {}
    feats_b = feats.astype(jnp.bfloat16)
    for name in sep_head_dict:
        h = feats_b
        for layer in params[name]['conv_layers']:
            bn = layer['bn']
            scale = bn['gamma'] / jnp.sqrt(bn['var'] + eps)
            shift = bn['beta'] - bn['mean'] * scale
            w = (layer['w'] * scale[None, :]).astype(jnp.bfloat16)
            xg = gather_neighbors(h, nbr_table)
            acc = jnp.dot(xg, w, preferred_element_type=jnp.float32)
            h = jnp.maximum(acc + shift[None, :], 0.0).astype(jnp.bfloat16)
        acc = jnp.dot(h, params[name]['w_out'].astype(jnp.bfloat16),
                      preferred_element_type=jnp.float32)
        ret[name] = acc + params[name]['b_out'][None, :]
    return ret


# --------------------------------- main ------------------------------------ #

if __name__ == "__main__":
    B, H, W = 2, 16, 16
    input_channels = 32
    kernel_size = 3
    sep_head_dict = {
        'hm':     {'out_channels': 3, 'num_conv': 2},
        'center': {'out_channels': 2, 'num_conv': 2},
        'dim':    {'out_channels': 3, 'num_conv': 3},
    }

    key = jax.random.PRNGKey(0)
    k_mask, k_feat, k_param = jax.random.split(key, 3)

    # Deterministic sparse active-voxel set.
    mask = jax.random.bernoulli(k_mask, 0.3, (B, H, W))
    indices = jnp.argwhere(mask).astype(jnp.int32)          # [N, 3] = (b, y, x)
    n_active = int(indices.shape[0])
    feats = jax.random.normal(k_feat, (n_active, input_channels), jnp.float32)

    nbr_table = build_neighbor_table(indices, B, (H, W), kernel_size)
    params = init_separate_head_params(k_param, input_channels, sep_head_dict,
                                       kernel_size)
    fused = prepare_fused_params(params, sep_head_dict, input_channels)

    out = separate_head_forward(fused, feats, nbr_table)
    out = jax.tree_util.tree_map(jax.block_until_ready, out)

    ref = separate_head_reference(params, sep_head_dict, feats, nbr_table)
    for name in sep_head_dict:
        assert out[name].shape == (n_active, sep_head_dict[name]['out_channels'])
        assert jnp.allclose(out[name], ref[name], rtol=1e-2, atol=1e-2), name

    print("KERNEL_OK")
</pallas_src>

<mosaic_0001>
module attributes {stable_mosaic.version = 11 : i64} {
  func.func @_conv_bn_relu_kernel(%arg0: i32, %arg1: memref<256x288xbf16, #tpu.memory_space<vmem>>, %arg2: memref<288x96xbf16, #tpu.memory_space<vmem>>, %arg3: memref<1x96xf32, #tpu.memory_space<vmem>>, %arg4: memref<256x96xbf16, #tpu.memory_space<vmem>>) attributes {dimension_semantics = [#tpu.dimension_semantics<parallel>], iteration_bounds = array<i64: 1>, scalar_prefetch = 0 : i64, scratch_operands = 0 : i64, tpu.core_type = #tpu.core_type<tc>, window_params = [{transform_indices = @transform_0, window_bounds = array<i64: 256, 288>}, {pipeline_mode = #tpu.pipeline_mode<synchronous>, transform_indices = @transform_1, window_bounds = array<i64: 288, 96>}, {pipeline_mode = #tpu.pipeline_mode<synchronous>, transform_indices = @transform_2, window_bounds = array<i64: 1, 96>}, {transform_indices = @transform_3, window_bounds = array<i64: 256, 96>}]} {
    %c0 = arith.constant 0 : index
    %c0_0 = arith.constant 0 : index
    %0 = vector.load %arg1[%c0, %c0_0] : memref<256x288xbf16, #tpu.memory_space<vmem>>, vector<256x288xbf16>
    %c0_1 = arith.constant 0 : index
    %c0_2 = arith.constant 0 : index
    %1 = vector.load %arg2[%c0_1, %c0_2] : memref<288x96xbf16, #tpu.memory_space<vmem>>, vector<288x96xbf16>
    %cst = arith.constant dense<0.000000e+00> : vector<256x96xf32>
    %2 = tpu.matmul %0, %1, %cst {dimension_numbers = #tpu.dot_dimension_numbers<[1], [0], [0], [1], [0, 0, 1, 1], [], []>} : vector<256x288xbf16>, vector<288x96xbf16>, vector<256x96xf32> -> vector<256x96xf32>
    %c0_3 = arith.constant 0 : index
    %c0_4 = arith.constant 0 : index
    %3 = vector.load %arg3[%c0_3, %c0_4] : memref<1x96xf32, #tpu.memory_space<vmem>>, vector<1x96xf32>
    %4 = vector.broadcast %3 : vector<1x96xf32> to vector<256x96xf32>
    %5 = arith.addf %2, %4 : vector<256x96xf32>
    %cst_5 = arith.constant 0.000000e+00 : f32
    %6 = vector.broadcast %cst_5 : f32 to vector<256x96xf32>
    %7 = arith.maximumf %5, %6 : vector<256x96xf32>
    %8 = arith.truncf %7 : vector<256x96xf32> to vector<256x96xbf16>
    %c0_6 = arith.constant 0 : index
    %c0_7 = arith.constant 0 : index
    %9 = vector.load %arg4[%c0_6, %c0_7] : memref<256x96xbf16, #tpu.memory_space<vmem>>, vector<256x96xbf16>
    tpu.vector_store %arg4[%c0_6, %c0_7], %8 {strides = array<i32>} : memref<256x96xbf16, #tpu.memory_space<vmem>>, vector<256x96xbf16>,
    return
  }
  func.func @transform_0(%arg0: i32) -> (i32, i32) {
    %c0_i32 = arith.constant 0 : i32
    %c0_i32_0 = arith.constant 0 : i32
    return %arg0, %c0_i32 : i32, i32
  }
  func.func @transform_1(%arg0: i32) -> (i32, i32) {
    %c0_i32 = arith.constant 0 : i32
    %c0_i32_0 = arith.constant 0 : i32
    %c0_i32_1 = arith.constant 0 : i32
    return %c0_i32, %c0_i32_0 : i32, i32
  }
  func.func @transform_2(%arg0: i32) -> (i32, i32) {
    %c0_i32 = arith.constant 0 : i32
    %c0_i32_0 = arith.constant 0 : i32
    %c0_i32_1 = arith.constant 0 : i32
    return %c0_i32, %c0_i32_0 : i32, i32
  }
  func.func @transform_3(%arg0: i32) -> (i32, i32) {
    %c0_i32 = arith.constant 0 : i32
    %c0_i32_0 = arith.constant 0 : i32
    return %arg0, %c0_i32 : i32, i32
  }
}

</mosaic_0001>

<llo_original>
// kernel: tpu_custom_call.1
$region0: #{tpu_custom_call.1}
  #allocation0 [shape = 'u32[]', space=smem, size = 0x4, offset = 0x4, fixed_abs, tag = 'smem constant byte address 0x4 - core index']
  #allocation1 [shape = 'u32[144,128]{1,0:T(1,128)}', space=vmem, size = 0x12000, scoped, tag = 'internal scratch']
  %s0 = inlined_call_operand.vmem [shape: bf16[256,288], index: 0, kind: input, shape index: {}]
  %s1 = inlined_call_operand.vmem [shape: bf16[288,96], index: 1, kind: input, shape index: {}]
  %s2 = inlined_call_operand.vmem [shape: f32[1,96], index: 2, kind: input, shape index: {}]
  %s3 = inlined_call_operand.vmem [shape: bf16[256,96], index: 3, kind: output, shape index: {}]
  %s4 = sld [smem:[#allocation0]]
  $region22: #{tpu_custom_call.1} parent=0
    _
  %s6 = ssub.s32 1, %s4
  %s7 = scalar_select 0, %s6, %s4
  // Predicated region
  $region2: #{tpu_custom_call.1} parent=0 // pred_check
    _
  $region3: #{tpu_custom_call.1} parent=0 // pred_check_branch
    %9 = sbr.rel (0) target = $region5
  $region4: #{tpu_custom_call.1} parent=0 // pred_region
    _
  $region5: #{tpu_custom_call.1} parent=0 // pred_fallthru
    _
  // Predicated region
  $region6: #{tpu_custom_call.1} parent=0 // pred_check
    _
  $region7: #{tpu_custom_call.1} parent=0 // pred_check_branch
    %11 = sbr.rel (0) target = $region9
  $region8: #{tpu_custom_call.1} parent=0 // pred_region
    _
  $region9: #{tpu_custom_call.1} parent=0 // pred_fallthru
    _
  // Predicated region
  $region10: #{tpu_custom_call.1} parent=0 // pred_check
    _
  $region11: #{tpu_custom_call.1} parent=0 // pred_check_branch
    %13 = sbr.rel (0) target = $region13
  $region12: #{tpu_custom_call.1} parent=0 // pred_region
    _
  $region13: #{tpu_custom_call.1} parent=0 // pred_fallthru
    _
  %v15 = vld [vmem:[%s0] sm:$0xff]
  %v16 = vld [vmem:[%s0 + $0x8] sm:$0xf]
  %v17 = vld [vmem:[%s0 + $0xc] sm:$0xff]
  %v18 = vld [vmem:[%s0 + $0x14] sm:$0xf]
  %v19 = vld [vmem:[%s0 + $0x18] sm:$0xff]
  %v20 = vld [vmem:[%s0 + $0x20] sm:$0xf]
  %v21 = vld [vmem:[%s0 + $0x24] sm:$0xff]
  %v22 = vld [vmem:[%s0 + $0x2c] sm:$0xf]
  %v23 = vld [vmem:[%s0 + $0x30] sm:$0xff]
  %v24 = vld [vmem:[%s0 + $0x38] sm:$0xf]
  %v25 = vld [vmem:[%s0 + $0x3c] sm:$0xff]
  %v26 = vld [vmem:[%s0 + $0x44] sm:$0xf]
  %v27 = vld [vmem:[%s0 + $0x48] sm:$0xff]
  %v28 = vld [vmem:[%s0 + $0x50] sm:$0xf]
  %v29 = vld [vmem:[%s0 + $0x54] sm:$0xff]
  %v30 = vld [vmem:[%s0 + $0x5c] sm:$0xf]
  %v31 = vld [vmem:[%s0 + $0x60] sm:$0xff]
  %v32 = vld [vmem:[%s0 + $0x68] sm:$0xf]
  %v33 = vld [vmem:[%s0 + $0x6c] sm:$0xff]
  %v34 = vld [vmem:[%s0 + $0x74] sm:$0xf]
  %v35 = vld [vmem:[%s0 + $0x78] sm:$0xff]
  %v36 = vld [vmem:[%s0 + $0x80] sm:$0xf]
  %v37 = vld [vmem:[%s0 + $0x84] sm:$0xff]
  %v38 = vld [vmem:[%s0 + $0x8c] sm:$0xf]
  %v39 = vld [vmem:[%s0 + $0x90] sm:$0xff]
  %v40 = vld [vmem:[%s0 + $0x98] sm:$0xf]
  %v41 = vld [vmem:[%s0 + $0x9c] sm:$0xff]
  %v42 = vld [vmem:[%s0 + $0xa4] sm:$0xf]
  %v43 = vld [vmem:[%s0 + $0xa8] sm:$0xff]
  %v44 = vld [vmem:[%s0 + $0xb0] sm:$0xf]
  %v45 = vld [vmem:[%s0 + $0xb4] sm:$0xff]
  %v46 = vld [vmem:[%s0 + $0xbc] sm:$0xf]
  %v47 = vld [vmem:[%s0 + $0xc0] sm:$0xff]
  %v48 = vld [vmem:[%s0 + $0xc8] sm:$0xf]
  %v49 = vld [vmem:[%s0 + $0xcc] sm:$0xff]
  %v50 = vld [vmem:[%s0 + $0xd4] sm:$0xf]
  %v51 = vld [vmem:[%s0 + $0xd8] sm:$0xff]
  %v52 = vld [vmem:[%s0 + $0xe0] sm:$0xf]
  %v53 = vld [vmem:[%s0 + $0xe4] sm:$0xff]
  %v54 = vld [vmem:[%s0 + $0xec] sm:$0xf]
  %v55 = vld [vmem:[%s0 + $0xf0] sm:$0xff]
  %v56 = vld [vmem:[%s0 + $0xf8] sm:$0xf]
  %v57 = vld [vmem:[%s0 + $0xfc] sm:$0xff]
  %v58 = vld [vmem:[%s0 + $0x104] sm:$0xf]
  %v59 = vld [vmem:[%s0 + $0x108] sm:$0xff]
  %v60 = vld [vmem:[%s0 + $0x110] sm:$0xf]
  %v61 = vld [vmem:[%s0 + $0x114] sm:$0xff]
  %v62 = vld [vmem:[%s0 + $0x11c] sm:$0xf]
  %v63 = vld [vmem:[%s0 + $0x120] sm:$0xff]
  %v64 = vld [vmem:[%s0 + $0x128] sm:$0xf]
  %v65 = vld [vmem:[%s0 + $0x12c] sm:$0xff]
  %v66 = vld [vmem:[%s0 + $0x134] sm:$0xf]
  %v67 = vld [vmem:[%s0 + $0x138] sm:$0xff]
  %v68 = vld [vmem:[%s0 + $0x140] sm:$0xf]
  %v69 = vld [vmem:[%s0 + $0x144] sm:$0xff]
  %v70 = vld [vmem:[%s0 + $0x14c] sm:$0xf]
  %v71 = vld [vmem:[%s0 + $0x150] sm:$0xff]
  %v72 = vld [vmem:[%s0 + $0x158] sm:$0xf]
  %v73 = vld [vmem:[%s0 + $0x15c] sm:$0xff]
  %v74 = vld [vmem:[%s0 + $0x164] sm:$0xf]
  %v75 = vld [vmem:[%s0 + $0x168] sm:$0xff]
  %v76 = vld [vmem:[%s0 + $0x170] sm:$0xf]
  %v77 = vld [vmem:[%s0 + $0x174] sm:$0xff]
  %v78 = vld [vmem:[%s0 + $0x17c] sm:$0xf]
  %v79 = vld [vmem:[%s1] sm:$0xf]
  %v80 = vld [vmem:[%s1 + $0x4] sm:$0xf]
  %v81 = vld [vmem:[%s1 + $0x8] sm:$0xf]
  %v82 = vld [vmem:[%s1 + $0xc] sm:$0xf]
  %v83 = vld [vmem:[%s1 + $0x10] sm:$0xf]
  %v84 = vld [vmem:[%s1 + $0x14] sm:$0xf]
  %v85 = vld [vmem:[%s1 + $0x18] sm:$0xf]
  %v86 = vld [vmem:[%s1 + $0x1c] sm:$0xf]
  %v87 = vld [vmem:[%s1 + $0x20] sm:$0xf]
  %v88 = vld [vmem:[%s1 + $0x24] sm:$0xf]
  %v89 = vld [vmem:[%s1 + $0x28] sm:$0xf]
  %v90 = vld [vmem:[%s1 + $0x2c] sm:$0xf]
  %v91 = vld [vmem:[%s1 + $0x30] sm:$0xf]
  %v92 = vld [vmem:[%s1 + $0x34] sm:$0xf]
  %v93 = vld [vmem:[%s1 + $0x38] sm:$0xf]
  %v94 = vld [vmem:[%s1 + $0x3c] sm:$0xf]
  %v95 = vld [vmem:[%s1 + $0x40] sm:$0xf]
  %v96 = vld [vmem:[%s1 + $0x44] sm:$0xf]
  %v97 = vld [vmem:[%s1 + $0x48] sm:$0xf]
  %v98 = vld [vmem:[%s1 + $0x4c] sm:$0xf]
  %v99 = vld [vmem:[%s1 + $0x50] sm:$0xf]
  %v100 = vld [vmem:[%s1 + $0x54] sm:$0xf]
  %v101 = vld [vmem:[%s1 + $0x58] sm:$0xf]
  %v102 = vld [vmem:[%s1 + $0x5c] sm:$0xf]
  %v103 = vld [vmem:[%s1 + $0x60] sm:$0xf]
  %v104 = vld [vmem:[%s1 + $0x64] sm:$0xf]
  %v105 = vld [vmem:[%s1 + $0x68] sm:$0xf]
  %v106 = vld [vmem:[%s1 + $0x6c] sm:$0xf]
  %v107 = vld [vmem:[%s1 + $0x70] sm:$0xf]
  %v108 = vld [vmem:[%s1 + $0x74] sm:$0xf]
  %v109 = vld [vmem:[%s1 + $0x78] sm:$0xf]
  %v110 = vld [vmem:[%s1 + $0x7c] sm:$0xf]
  %v111 = vld [vmem:[%s1 + $0x80] sm:$0xf]
  %v112 = vld [vmem:[%s1 + $0x84] sm:$0xf]
  %v113 = vld [vmem:[%s1 + $0x88] sm:$0xf]
  %v114 = vld [vmem:[%s1 + $0x8c] sm:$0xf]
  %v115 = vld [vmem:[%s2] sm:$0x1]
  %v117 = vlaneseq
  %v118 = vshrl.u32 %v117, 7
  %v119 = vsub.s32 0, %v118
  %v120 = vrot.slane %v115, %v119
  %v186 = vunpack.c.l.b16 %v15
  %v187 = vunpack.c.h.b16 %v15
  %v188 = vunpack.c.l.b16 %v16
  %v189 = vunpack.c.l.b16 %v17
  %v190 = vunpack.c.h.b16 %v17
  %v191 = vunpack.c.l.b16 %v18
  %v192 = vunpack.c.l.b16 %v19
  %v193 = vunpack.c.h.b16 %v19
  %v194 = vunpack.c.l.b16 %v20
  %v195 = vunpack.c.l.b16 %v21
  %v196 = vunpack.c.h.b16 %v21
  %v197 = vunpack.c.l.b16 %v22
  %v198 = vunpack.c.l.b16 %v23
  %v199 = vunpack.c.h.b16 %v23
  %v200 = vunpack.c.l.b16 %v24
  %v201 = vunpack.c.l.b16 %v25
  %v202 = vunpack.c.h.b16 %v25
  %v203 = vunpack.c.l.b16 %v26
  %v204 = vunpack.c.l.b16 %v27
  %v205 = vunpack.c.h.b16 %v27
  %v206 = vunpack.c.l.b16 %v28
  %v207 = vunpack.c.l.b16 %v29
  %v208 = vunpack.c.h.b16 %v29
  %v209 = vunpack.c.l.b16 %v30
  %v210 = vunpack.c.l.b16 %v31
  %v211 = vunpack.c.h.b16 %v31
  %v212 = vunpack.c.l.b16 %v32
  %v213 = vunpack.c.l.b16 %v33
  %v214 = vunpack.c.h.b16 %v33
  %v215 = vunpack.c.l.b16 %v34
  %v216 = vunpack.c.l.b16 %v35
  %v217 = vunpack.c.h.b16 %v35
  %v218 = vunpack.c.l.b16 %v36
  %v219 = vunpack.c.l.b16 %v37
  %v220 = vunpack.c.h.b16 %v37
  %v221 = vunpack.c.l.b16 %v38
  %v222 = vunpack.c.l.b16 %v39
  %v223 = vunpack.c.h.b16 %v39
  %v224 = vunpack.c.l.b16 %v40
  %v225 = vunpack.c.l.b16 %v41
  %v226 = vunpack.c.h.b16 %v41
  %v227 = vunpack.c.l.b16 %v42
  %v228 = vunpack.c.l.b16 %v43
  %v229 = vunpack.c.h.b16 %v43
  %v230 = vunpack.c.l.b16 %v44
  %v231 = vunpack.c.l.b16 %v45
  %v232 = vunpack.c.h.b16 %v45
  %v233 = vunpack.c.l.b16 %v46
  %v234 = vunpack.c.l.b16 %v47
  %v235 = vunpack.c.h.b16 %v47
  %v236 = vunpack.c.l.b16 %v48
  %v237 = vunpack.c.l.b16 %v49
  %v238 = vunpack.c.h.b16 %v49
  %v239 = vunpack.c.l.b16 %v50
  %v240 = vunpack.c.l.b16 %v51
  %v241 = vunpack.c.h.b16 %v51
  %v242 = vunpack.c.l.b16 %v52
  %v243 = vunpack.c.l.b16 %v53
  %v244 = vunpack.c.h.b16 %v53
  %v245 = vunpack.c.l.b16 %v54
  %v246 = vunpack.c.l.b16 %v55
  %v247 = vunpack.c.h.b16 %v55
  %v248 = vunpack.c.l.b16 %v56
  %v249 = vunpack.c.l.b16 %v57
  %v250 = vunpack.c.h.b16 %v57
  %v251 = vunpack.c.l.b16 %v58
  %v252 = vunpack.c.l.b16 %v59
  %v253 = vunpack.c.h.b16 %v59
  %v254 = vunpack.c.l.b16 %v60
  %v255 = vunpack.c.l.b16 %v61
  %v256 = vunpack.c.h.b16 %v61
  %v257 = vunpack.c.l.b16 %v62
  %v258 = vunpack.c.l.b16 %v63
  %v259 = vunpack.c.h.b16 %v63
  %v260 = vunpack.c.l.b16 %v64
  %v261 = vunpack.c.l.b16 %v65
  %v262 = vunpack.c.h.b16 %v65
  %v263 = vunpack.c.l.b16 %v66
  %v264 = vunpack.c.l.b16 %v67
  %v265 = vunpack.c.h.b16 %v67
  %v266 = vunpack.c.l.b16 %v68
  %v267 = vunpack.c.l.b16 %v69
  %v268 = vunpack.c.h.b16 %v69
  %v269 = vunpack.c.l.b16 %v70
  %v270 = vunpack.c.l.b16 %v71
  %v271 = vunpack.c.h.b16 %v71
  %v272 = vunpack.c.l.b16 %v72
  %v273 = vunpack.c.l.b16 %v73
  %v274 = vunpack.c.h.b16 %v73
  %v275 = vunpack.c.l.b16 %v74
  %v276 = vunpack.c.l.b16 %v75
  %v277 = vunpack.c.h.b16 %v75
  %v278 = vunpack.c.l.b16 %v76
  %v279 = vunpack.c.l.b16 %v77
  %v280 = vunpack.c.h.b16 %v77
  %v281 = vunpack.c.l.b16 %v78
  %v282 = vpack.c.b16 %v189, %v186
  %v283 = vpack.c.b16 %v190, %v187
  %v284 = vpack.c.b16 %v191, %v188
  %v285 = vpack.c.b16 %v195, %v192
  %v286 = vpack.c.b16 %v196, %v193
  %v287 = vpack.c.b16 %v197, %v194
  %v288 = vpack.c.b16 %v201, %v198
  %v289 = vpack.c.b16 %v202, %v199
  %v290 = vpack.c.b16 %v203, %v200
  %v291 = vpack.c.b16 %v207, %v204
  %v292 = vpack.c.b16 %v208, %v205
  %v293 = vpack.c.b16 %v209, %v206
  %v294 = vpack.c.b16 %v213, %v210
  %v295 = vpack.c.b16 %v214, %v211
  %v296 = vpack.c.b16 %v215, %v212
  %v297 = vpack.c.b16 %v219, %v216
  %v298 = vpack.c.b16 %v220, %v217
  %v299 = vpack.c.b16 %v221, %v218
  %v300 = vpack.c.b16 %v225, %v222
  %v301 = vpack.c.b16 %v226, %v223
  %v302 = vpack.c.b16 %v227, %v224
  %v303 = vpack.c.b16 %v231, %v228
  %v304 = vpack.c.b16 %v232, %v229
  %v305 = vpack.c.b16 %v233, %v230
  %v306 = vpack.c.b16 %v237, %v234
  %v307 = vpack.c.b16 %v238, %v235
  %v308 = vpack.c.b16 %v239, %v236
  %v309 = vpack.c.b16 %v243, %v240
  %v310 = vpack.c.b16 %v244, %v241
  %v311 = vpack.c.b16 %v245, %v242
  %v312 = vpack.c.b16 %v249, %v246
  %v313 = vpack.c.b16 %v250, %v247
  %v314 = vpack.c.b16 %v251, %v248
  %v315 = vpack.c.b16 %v255, %v252
  %v316 = vpack.c.b16 %v256, %v253
  %v317 = vpack.c.b16 %v257, %v254
  %v318 = vpack.c.b16 %v261, %v258
  %v319 = vpack.c.b16 %v262, %v259
  %v320 = vpack.c.b16 %v263, %v260
  %v321 = vpack.c.b16 %v267, %v264
  %v322 = vpack.c.b16 %v268, %v265
  %v323 = vpack.c.b16 %v269, %v266
  %v324 = vpack.c.b16 %v273, %v270
  %v325 = vpack.c.b16 %v274, %v271
  %v326 = vpack.c.b16 %v275, %v272
  %v327 = vpack.c.b16 %v279, %v276
  %v328 = vpack.c.b16 %v280, %v277
  %v329 = vpack.c.b16 %v281, %v278
  %v398 = vunpack.c.l.b16 %v79
  %v399 = vunpack.c.l.b16 %v80
  %v400 = vunpack.c.l.b16 %v81
  %v401 = vunpack.c.l.b16 %v82
  %v402 = vunpack.c.l.b16 %v83
  %v403 = vunpack.c.l.b16 %v84
  %v404 = vunpack.c.l.b16 %v85
  %v405 = vunpack.c.l.b16 %v86
  %v406 = vunpack.c.l.b16 %v87
  %v407 = vunpack.c.l.b16 %v88
  %v408 = vunpack.c.l.b16 %v89
  %v409 = vunpack.c.l.b16 %v90
  %v410 = vunpack.c.l.b16 %v91
  %v411 = vunpack.c.l.b16 %v92
  %v412 = vunpack.c.l.b16 %v93
  %v413 = vunpack.c.l.b16 %v94
  %v414 = vunpack.c.l.b16 %v95
  %v415 = vunpack.c.l.b16 %v96
  %v416 = vunpack.c.l.b16 %v97
  %v417 = vunpack.c.l.b16 %v98
  %v418 = vunpack.c.l.b16 %v99
  %v419 = vunpack.c.l.b16 %v100
  %v420 = vunpack.c.l.b16 %v101
  %v421 = vunpack.c.l.b16 %v102
  %v422 = vunpack.c.l.b16 %v103
  %v423 = vunpack.c.l.b16 %v104
  %v424 = vunpack.c.l.b16 %v105
  %v425 = vunpack.c.l.b16 %v106
  %v426 = vunpack.c.l.b16 %v107
  %v427 = vunpack.c.l.b16 %v108
  %v428 = vunpack.c.l.b16 %v109
  %v429 = vunpack.c.l.b16 %v110
  %v430 = vunpack.c.l.b16 %v111
  %v431 = vunpack.c.l.b16 %v112
  %v432 = vunpack.c.l.b16 %v113
  %v433 = vunpack.c.l.b16 %v114
  %v434 = vpack.c.b16 %v399, %v398
  %v435 = vpack.c.b16 %v401, %v400
  %v436 = vpack.c.b16 %v403, %v402
  %v437 = vpack.c.b16 %v405, %v404
  %v438 = vpack.c.b16 %v407, %v406
  %v439 = vpack.c.b16 %v409, %v408
  %v440 = vpack.c.b16 %v411, %v410
  %v441 = vpack.c.b16 %v413, %v412
  %v442 = vpack.c.b16 %v415, %v414
  %v443 = vpack.c.b16 %v417, %v416
  %v444 = vpack.c.b16 %v419, %v418
  %v445 = vpack.c.b16 %v421, %v420
  %v446 = vpack.c.b16 %v423, %v422
  %v447 = vpack.c.b16 %v425, %v424
  %v448 = vpack.c.b16 %v427, %v426
  %v449 = vpack.c.b16 %v429, %v428
  %v450 = vpack.c.b16 %v431, %v430
  %v451 = vpack.c.b16 %v433, %v432
  %vm470 = vcmask 261120
  %v472 = vsel %vm470, %v284, 0
  %v475 = vsel %vm470, %v287, 0
  %v478 = vsel %vm470, %v290, 0
  %v481 = vsel %vm470, %v293, 0
  %v484 = vsel %vm470, %v296, 0
  %v487 = vsel %vm470, %v299, 0
  %v490 = vsel %vm470, %v302, 0
  %v493 = vsel %vm470, %v305, 0
  %v496 = vsel %vm470, %v308, 0
  %v499 = vsel %vm470, %v311, 0
  %v502 = vsel %vm470, %v314, 0
  %v505 = vsel %vm470, %v317, 0
  %v508 = vsel %vm470, %v320, 0
  %v511 = vsel %vm470, %v323, 0
  %v514 = vsel %vm470, %v326, 0
  %v517 = vsel %vm470, %v329, 0
  %519 = vmatprep.subr.bf16.mxu0 0
  %520 = vmatpush1.bf16.msra.mxu0 %v434
  %521 = vmatprep.subr.bf16.mxu0 0
  %522 = vmatpush1.bf16.msra.mxu0 %v435
  %523 = vmatprep.subr.bf16.mxu0 0
  %524 = vmatpush1.bf16.msra.mxu0 %v436
  %525 = vmatprep.subr.bf16.mxu0 0
  %526 = vmatpush1.bf16.msra.mxu0 %v437
  %527 = vmatprep.subr.bf16.mxu0 0
  %528 = vmatpush1.bf16.msra.mxu0 %v438
  %529 = vmatprep.subr.bf16.mxu0 0
  %530 = vmatpush1.bf16.msra.mxu0 %v439
  %531 = vmatprep.subr.bf16.mxu0 0
  %532 = vmatpush1.bf16.msra.mxu0 %v440
  %533 = vmatprep.subr.bf16.mxu0 0
  %534 = vmatpush1.bf16.msra.mxu0 %v441
  %535 = vmatprep.subr.bf16.mxu0 0
  %536 = vmatpush1.bf16.msra.mxu0 %v442
  %537 = vmatprep.subr.bf16.mxu0 0
  %538 = vmatpush1.bf16.msra.mxu0 %v443
  %539 = vmatprep.subr.bf16.mxu0 0
  %540 = vmatpush1.bf16.msra.mxu0 %v444
  %541 = vmatprep.subr.bf16.mxu0 0
  %542 = vmatpush1.bf16.msra.mxu0 %v445
  %543 = vmatprep.subr.bf16.mxu0 0
  %544 = vmatpush1.bf16.msra.mxu0 %v446
  %545 = vmatprep.subr.bf16.mxu0 0
  %546 = vmatpush1.bf16.msra.mxu0 %v447
  %547 = vmatprep.subr.bf16.mxu0 0
  %548 = vmatpush1.bf16.msra.mxu0 %v448
  %549 = vmatprep.subr.bf16.mxu0 0
  %550 = vmatpush1.bf16.msra.mxu0 %v449
  %551 = vmatprep.mubr.bf16.mxu0 %v283
  %552 = vmatmul.mubr.bf16.gmra.mrb[0].mxu0 %v282
  %v553 = vpop.f32.mrb[0].mxu0
  %v554 = vadd.f32 %v120, %v553
  %v555 = vpop.f32.mrb[0].mxu0
  %v556 = vpop.f32.mrb[0].mxu0
  %v557 = vadd.f32 %v120, %v556
  %v558 = vpop.f32.mrb[0].mxu0
  %559 = vmatprep.mubr.bf16.mxu0 %v286
  %560 = vmatmul.mubr.bf16.gmra.mrb[0].mxu0 %v285
  %v561 = vpop.f32.mrb[0].mxu0
  %v562 = vadd.f32 %v120, %v561
  %v563 = vpop.f32.mrb[0].mxu0
  %v564 = vpop.f32.mrb[0].mxu0
  %v565 = vadd.f32 %v120, %v564
  %v566 = vpop.f32.mrb[0].mxu0
  %567 = vmatprep.mubr.bf16.mxu0 %v289
  %568 = vmatmul.mubr.bf16.gmra.mrb[0].mxu0 %v288
  %v569 = vpop.f32.mrb[0].mxu0
  %v570 = vadd.f32 %v120, %v569
  %v571 = vpop.f32.mrb[0].mxu0
  %v572 = vpop.f32.mrb[0].mxu0
  %v573 = vadd.f32 %v120, %v572
  %v574 = vpop.f32.mrb[0].mxu0
  %575 = vmatprep.mubr.bf16.mxu0 %v292
  %576 = vmatmul.mubr.bf16.gmra.mrb[0].mxu0 %v291
  %v577 = vpop.f32.mrb[0].mxu0
  %v578 = vadd.f32 %v120, %v577
  %v579 = vpop.f32.mrb[0].mxu0
  %v580 = vpop.f32.mrb[0].mxu0
  %v581 = vadd.f32 %v120, %v580
  %v582 = vpop.f32.mrb[0].mxu0
  %583 = vmatprep.mubr.bf16.mxu0 %v295
  %584 = vmatmul.mubr.bf16.gmra.mrb[0].mxu0 %v294
  %v585 = vpop.f32.mrb[0].mxu0
  %v586 = vadd.f32 %v120, %v585
  %v587 = vpop.f32.mrb[0].mxu0
  %v588 = vpop.f32.mrb[0].mxu0
  %v589 = vadd.f32 %v120, %v588
  %v590 = vpop.f32.mrb[0].mxu0
  %591 = vmatprep.mubr.bf16.mxu0 %v298
  %592 = vmatmul.mubr.bf16.gmra.mrb[0].mxu0 %v297
  %v593 = vpop.f32.mrb[0].mxu0
  %v594 = vadd.f32 %v120, %v593
  %v595 = vpop.f32.mrb[0].mxu0
  %v596 = vpop.f32.mrb[0].mxu0
  %v597 = vadd.f32 %v120, %v596
  %v598 = vpop.f32.mrb[0].mxu0
  %599 = vmatprep.mubr.bf16.mxu0 %v301
  %600 = vmatmul.mubr.bf16.gmra.mrb[0].mxu0 %v300
  %v601 = vpop.f32.mrb[0].mxu0
  %v602 = vadd.f32 %v120, %v601
  %v603 = vpop.f32.mrb[0].mxu0
  %v604 = vpop.f32.mrb[0].mxu0
  %v605 = vadd.f32 %v120, %v604
  %v606 = vpop.f32.mrb[0].mxu0
  %607 = vmatprep.mubr.bf16.mxu0 %v304
  %608 = vmatmul.mubr.bf16.gmra.mrb[0].mxu0 %v303
  %v609 = vpop.f32.mrb[0].mxu0
  %v610 = vadd.f32 %v120, %v609
  %v611 = vpop.f32.mrb[0].mxu0
  %v612 = vpop.f32.mrb[0].mxu0
  %v613 = vadd.f32 %v120, %v612
  %v614 = vpop.f32.mrb[0].mxu0
  %615 = vmatprep.mubr.bf16.mxu0 %v307
  %616 = vmatmul.mubr.bf16.gmra.mrb[0].mxu0 %v306
  %v617 = vpop.f32.mrb[0].mxu0
  %v618 = vadd.f32 %v120, %v617
  %v619 = vpop.f32.mrb[0].mxu0
  %v620 = vpop.f32.mrb[0].mxu0
  %v621 = vadd.f32 %v120, %v620
  %v622 = vpop.f32.mrb[0].mxu0
  %623 = vmatprep.mubr.bf16.mxu0 %v310
  %624 = vmatmul.mubr.bf16.gmra.mrb[0].mxu0 %v309
  %v625 = vpop.f32.mrb[0].mxu0
  %v626 = vadd.f32 %v120, %v625
  %v627 = vpop.f32.mrb[0].mxu0
  %v628 = vpop.f32.mrb[0].mxu0
  %v629 = vadd.f32 %v120, %v628
  %v630 = vpop.f32.mrb[0].mxu0
  %631 = vmatprep.mubr.bf16.mxu0 %v313
  %632 = vmatmul.mubr.bf16.gmra.mrb[0].mxu0 %v312
  %v633 = vpop.f32.mrb[0].mxu0
  %v634 = vadd.f32 %v120, %v633
  %v635 = vpop.f32.mrb[0].mxu0
  %v636 = vpop.f32.mrb[0].mxu0
  %v637 = vadd.f32 %v120, %v636
  %v638 = vpop.f32.mrb[0].mxu0
  %639 = vmatprep.mubr.bf16.mxu0 %v316
  %640 = vmatmul.mubr.bf16.gmra.mrb[0].mxu0 %v315
  %v641 = vpop.f32.mrb[0].mxu0
  %v642 = vadd.f32 %v120, %v641
  %v643 = vpop.f32.mrb[0].mxu0
  %v644 = vpop.f32.mrb[0].mxu0
  %v645 = vadd.f32 %v120, %v644
  %v646 = vpop.f32.mrb[0].mxu0
  %647 = vmatprep.mubr.bf16.mxu0 %v319
  %648 = vmatmul.mubr.bf16.gmra.mrb[0].mxu0 %v318
  %v649 = vpop.f32.mrb[0].mxu0
  %v650 = vadd.f32 %v120, %v649
  %v651 = vpop.f32.mrb[0].mxu0
  %v652 = vpop.f32.mrb[0].mxu0
  %v653 = vadd.f32 %v120, %v652
  %v654 = vpop.f32.mrb[0].mxu0
  %655 = vmatprep.mubr.bf16.mxu0 %v322
  %656 = vmatmul.mubr.bf16.gmra.mrb[0].mxu0 %v321
  %v657 = vpop.f32.mrb[0].mxu0
  %v658 = vadd.f32 %v120, %v657
  %v659 = vpop.f32.mrb[0].mxu0
  %v660 = vpop.f32.mrb[0].mxu0
  %v661 = vadd.f32 %v120, %v660
  %v662 = vpop.f32.mrb[0].mxu0
  %663 = vmatprep.mubr.bf16.mxu0 %v325
  %664 = vmatmul.mubr.bf16.gmra.mrb[0].mxu0 %v324
  %v665 = vpop.f32.mrb[0].mxu0
  %v666 = vadd.f32 %v120, %v665
  %v667 = vpop.f32.mrb[0].mxu0
  %v668 = vpop.f32.mrb[0].mxu0
  %v669 = vadd.f32 %v120, %v668
  %v670 = vpop.f32.mrb[0].mxu0
  %671 = vmatprep.mubr.bf16.mxu0 %v328
  %672 = vmatmul.mubr.bf16.gmra.mrb[0].mxu0 %v327
  %v673 = vpop.f32.mrb[0].mxu0
  %v674 = vadd.f32 %v120, %v673
  %v675 = vpop.f32.mrb[0].mxu0
  %v676 = vpop.f32.mrb[0].mxu0
  %v677 = vadd.f32 %v120, %v676
  %v678 = vpop.f32.mrb[0].mxu0
  %679 = vdwg.mxu0
  %680 = vmatprep.subr.bf16.mxu0 0
  %681 = vmatpush1.bf16.msra.mxu0 %v450
  %682 = vmatprep.subr.bf16.mxu0 0
  %683 = vmatpush1.bf16.msra.mxu0 %v451
  %684 = vmatprep.subr.bf16.mxu0 0
  %685 = vmatpush1.bf16.msra.mxu0 0
  %686 = vmatprep.subr.bf16.mxu0 0
  %687 = vmatpush1.bf16.msra.mxu0 0
  %688 = vmatprep.subr.bf16.mxu0 0
  %689 = vmatpush1.bf16.msra.mxu0 0
  %690 = vmatprep.subr.bf16.mxu0 0
  %691 = vmatpush1.bf16.msra.mxu0 0
  %692 = vmatprep.subr.bf16.mxu0 0
  %693 = vmatpush1.bf16.msra.mxu0 0
  %694 = vmatprep.subr.bf16.mxu0 0
  %695 = vmatpush1.bf16.msra.mxu0 0
  %696 = vmatprep.subr.bf16.mxu0 0
  %697 = vmatpush1.bf16.msra.mxu0 0
  %698 = vmatprep.subr.bf16.mxu0 0
  %699 = vmatpush1.bf16.msra.mxu0 0
  %700 = vmatprep.subr.bf16.mxu0 0
  %701 = vmatpush1.bf16.msra.mxu0 0
  %702 = vmatprep.subr.bf16.mxu0 0
  %703 = vmatpush1.bf16.msra.mxu0 0
  %704 = vmatprep.subr.bf16.mxu0 0
  %705 = vmatpush1.bf16.msra.mxu0 0
  %706 = vmatprep.subr.bf16.mxu0 0
  %707 = vmatpush1.bf16.msra.mxu0 0
  %708 = vmatprep.subr.bf16.mxu0 0
  %709 = vmatpush1.bf16.msra.mxu0 0
  %710 = vmatprep.subr.bf16.mxu0 0
  %711 = vmatpush1.bf16.msra.mxu0 0
  %712 = vmatprep.mubr.bf16.mxu0 0
  %713 = vmatmul.mubr.bf16.gmra.mrb[0].mxu0 %v472
  %v714 = vpop.f32.mrb[0].mxu0
  %v715 = vadd.f32 %v554, %v714
  %v716 = vpop.f32.mrb[0].mxu0
  %v717 = vpop.f32.mrb[0].mxu0
  %v718 = vadd.f32 %v557, %v717
  %v719 = vpop.f32.mrb[0].mxu0
  %720 = vmatprep.mubr.bf16.mxu0 0
  %721 = vmatmul.mubr.bf16.gmra.mrb[0].mxu0 %v475
  %v722 = vpop.f32.mrb[0].mxu0
  %v723 = vadd.f32 %v562, %v722
  %v724 = vpop.f32.mrb[0].mxu0
  %v725 = vpop.f32.mrb[0].mxu0
  %v726 = vadd.f32 %v565, %v725
  %v727 = vpop.f32.mrb[0].mxu0
  %728 = vmatprep.mubr.bf16.mxu0 0
  %729 = vmatmul.mubr.bf16.gmra.mrb[0].mxu0 %v478
  %v730 = vpop.f32.mrb[0].mxu0
  %v731 = vadd.f32 %v570, %v730
  %v732 = vpop.f32.mrb[0].mxu0
  %v733 = vpop.f32.mrb[0].mxu0
  %v734 = vadd.f32 %v573, %v733
  %v735 = vpop.f32.mrb[0].mxu0
  %736 = vmatprep.mubr.bf16.mxu0 0
  %737 = vmatmul.mubr.bf16.gmra.mrb[0].mxu0 %v481
  %v738 = vpop.f32.mrb[0].mxu0
  %v739 = vadd.f32 %v578, %v738
  %v740 = vpop.f32.mrb[0].mxu0
  %v741 = vpop.f32.mrb[0].mxu0
  %v742 = vadd.f32 %v581, %v741
  %v743 = vpop.f32.mrb[0].mxu0
  %744 = vmatprep.mubr.bf16.mxu0 0
  %745 = vmatmul.mubr.bf16.gmra.mrb[0].mxu0 %v484
  %v746 = vpop.f32.mrb[0].mxu0
  %v747 = vadd.f32 %v586, %v746
  %v748 = vpop.f32.mrb[0].mxu0
  %v749 = vpop.f32.mrb[0].mxu0
  %v750 = vadd.f32 %v589, %v749
  %v751 = vpop.f32.mrb[0].mxu0
  %752 = vmatprep.mubr.bf16.mxu0 0
  %753 = vmatmul.mubr.bf16.gmra.mrb[0].mxu0 %v487
  %v754 = vpop.f32.mrb[0].mxu0
  %v755 = vadd.f32 %v594, %v754
  %v756 = vpop.f32.mrb[0].mxu0
  %v757 = vpop.f32.mrb[0].mxu0
  %v758 = vadd.f32 %v597, %v757
  %v759 = vpop.f32.mrb[0].mxu0
  %760 = vmatprep.mubr.bf16.mxu0 0
  %761 = vmatmul.mubr.bf16.gmra.mrb[0].mxu0 %v490
  %v762 = vpop.f32.mrb[0].mxu0
  %v763 = vadd.f32 %v602, %v762
  %v764 = vpop.f32.mrb[0].mxu0
  %v765 = vpop.f32.mrb[0].mxu0
  %v766 = vadd.f32 %v605, %v765
  %v767 = vpop.f32.mrb[0].mxu0
  %768 = vmatprep.mubr.bf16.mxu0 0
  %769 = vmatmul.mubr.bf16.gmra.mrb[0].mxu0 %v493
  %v770 = vpop.f32.mrb[0].mxu0
  %v771 = vadd.f32 %v610, %v770
  %v772 = vpop.f32.mrb[0].mxu0
  %v773 = vpop.f32.mrb[0].mxu0
  %v774 = vadd.f32 %v613, %v773
  %v775 = vpop.f32.mrb[0].mxu0
  %776 = vmatprep.mubr.bf16.mxu0 0
  %777 = vmatmul.mubr.bf16.gmra.mrb[0].mxu0 %v496
  %v778 = vpop.f32.mrb[0].mxu0
  %v779 = vadd.f32 %v618, %v778
  %v780 = vpop.f32.mrb[0].mxu0
  %v781 = vpop.f32.mrb[0].mxu0
  %v782 = vadd.f32 %v621, %v781
  %v783 = vpop.f32.mrb[0].mxu0
  %784 = vmatprep.mubr.bf16.mxu0 0
  %785 = vmatmul.mubr.bf16.gmra.mrb[0].mxu0 %v499
  %v786 = vpop.f32.mrb[0].mxu0
  %v787 = vadd.f32 %v626, %v786
  %v788 = vpop.f32.mrb[0].mxu0
  %v789 = vpop.f32.mrb[0].mxu0
  %v790 = vadd.f32 %v629, %v789
  %v791 = vpop.f32.mrb[0].mxu0
  %792 = vmatprep.mubr.bf16.mxu0 0
  %793 = vmatmul.mubr.bf16.gmra.mrb[0].mxu0 %v502
  %v794 = vpop.f32.mrb[0].mxu0
  %v795 = vadd.f32 %v634, %v794
  %v796 = vpop.f32.mrb[0].mxu0
  %v797 = vpop.f32.mrb[0].mxu0
  %v798 = vadd.f32 %v637, %v797
  %v799 = vpop.f32.mrb[0].mxu0
  %800 = vmatprep.mubr.bf16.mxu0 0
  %801 = vmatmul.mubr.bf16.gmra.mrb[0].mxu0 %v505
  %v802 = vpop.f32.mrb[0].mxu0
  %v803 = vadd.f32 %v642, %v802
  %v804 = vpop.f32.mrb[0].mxu0
  %v805 = vpop.f32.mrb[0].mxu0
  %v806 = vadd.f32 %v645, %v805
  %v807 = vpop.f32.mrb[0].mxu0
  %808 = vmatprep.mubr.bf16.mxu0 0
  %809 = vmatmul.mubr.bf16.gmra.mrb[0].mxu0 %v508
  %v810 = vpop.f32.mrb[0].mxu0
  %v811 = vadd.f32 %v650, %v810
  %v812 = vpop.f32.mrb[0].mxu0
  %v813 = vpop.f32.mrb[0].mxu0
  %v814 = vadd.f32 %v653, %v813
  %v815 = vpop.f32.mrb[0].mxu0
  %816 = vmatprep.mubr.bf16.mxu0 0
  %817 = vmatmul.mubr.bf16.gmra.mrb[0].mxu0 %v511
  %v818 = vpop.f32.mrb[0].mxu0
  %v819 = vadd.f32 %v658, %v818
  %v820 = vpop.f32.mrb[0].mxu0
  %v821 = vpop.f32.mrb[0].mxu0
  %v822 = vadd.f32 %v661, %v821
  %v823 = vpop.f32.mrb[0].mxu0
  %824 = vmatprep.mubr.bf16.mxu0 0
  %825 = vmatmul.mubr.bf16.gmra.mrb[0].mxu0 %v514
  %v826 = vpop.f32.mrb[0].mxu0
  %v827 = vadd.f32 %v666, %v826
  %v828 = vpop.f32.mrb[0].mxu0
  %v829 = vpop.f32.mrb[0].mxu0
  %v830 = vadd.f32 %v669, %v829
  %v831 = vpop.f32.mrb[0].mxu0
  %832 = vmatprep.mubr.bf16.mxu0 0
  %833 = vmatmul.mubr.bf16.gmra.mrb[0].mxu0 %v517
  %v834 = vpop.f32.mrb[0].mxu0
  %v835 = vadd.f32 %v674, %v834
  %v836 = vpop.f32.mrb[0].mxu0
  %v837 = vpop.f32.mrb[0].mxu0
  %v838 = vadd.f32 %v677, %v837
  %v839 = vpop.f32.mrb[0].mxu0
  %840 = vdwg.mxu0
  %v841 = vmax.f32 %v715, 0.0
  %v842 = vmax.f32 %v718, 0.0
  %v843 = vmax.f32 %v723, 0.0
  %v844 = vmax.f32 %v726, 0.0
  %v845 = vmax.f32 %v731, 0.0
  %v846 = vmax.f32 %v734, 0.0
  %v847 = vmax.f32 %v739, 0.0
  %v848 = vmax.f32 %v742, 0.0
  %v849 = vmax.f32 %v747, 0.0
  %v850 = vmax.f32 %v750, 0.0
  %v851 = vmax.f32 %v755, 0.0
  %v852 = vmax.f32 %v758, 0.0
  %v853 = vmax.f32 %v763, 0.0
  %v854 = vmax.f32 %v766, 0.0
  %v855 = vmax.f32 %v771, 0.0
  %v856 = vmax.f32 %v774, 0.0
  %v857 = vmax.f32 %v779, 0.0
  %v858 = vmax.f32 %v782, 0.0
  %v859 = vmax.f32 %v787, 0.0
  %v860 = vmax.f32 %v790, 0.0
  %v861 = vmax.f32 %v795, 0.0
  %v862 = vmax.f32 %v798, 0.0
  %v863 = vmax.f32 %v803, 0.0
  %v864 = vmax.f32 %v806, 0.0
  %v865 = vmax.f32 %v811, 0.0
  %v866 = vmax.f32 %v814, 0.0
  %v867 = vmax.f32 %v819, 0.0
  %v868 = vmax.f32 %v822, 0.0
  %v869 = vmax.f32 %v827, 0.0
  %v870 = vmax.f32 %v830, 0.0
  %v871 = vmax.f32 %v835, 0.0
  %v872 = vmax.f32 %v838, 0.0
  %v873 = vpack.c.bf16 %v842, %v841
  %v874 = vpack.c.bf16 %v844, %v843
  %v875 = vpack.c.bf16 %v846, %v845
  %v876 = vpack.c.bf16 %v848, %v847
  %v877 = vpack.c.bf16 %v850, %v849
  %v878 = vpack.c.bf16 %v852, %v851
  %v879 = vpack.c.bf16 %v854, %v853
  %v880 = vpack.c.bf16 %v856, %v855
  %v881 = vpack.c.bf16 %v858, %v857
  %v882 = vpack.c.bf16 %v860, %v859
  %v883 = vpack.c.bf16 %v862, %v861
  %v884 = vpack.c.bf16 %v864, %v863
  %v885 = vpack.c.bf16 %v866, %v865
  %v886 = vpack.c.bf16 %v868, %v867
  %v887 = vpack.c.bf16 %v870, %v869
  %v888 = vpack.c.bf16 %v872, %v871
  %v905 = vunpack.c.l.b16 %v873
  %v906 = vunpack.c.h.b16 %v873
  %v907 = vunpack.c.l.b16 %v874
  %v908 = vunpack.c.h.b16 %v874
  %v909 = vunpack.c.l.b16 %v875
  %v910 = vunpack.c.h.b16 %v875
  %v911 = vunpack.c.l.b16 %v876
  %v912 = vunpack.c.h.b16 %v876
  %v913 = vunpack.c.l.b16 %v877
  %v914 = vunpack.c.h.b16 %v877
  %v915 = vunpack.c.l.b16 %v878
  %v916 = vunpack.c.h.b16 %v878
  %v917 = vunpack.c.l.b16 %v879
  %v918 = vunpack.c.h.b16 %v879
  %v919 = vunpack.c.l.b16 %v880
  %v920 = vunpack.c.h.b16 %v880
  %v921 = vunpack.c.l.b16 %v881
  %v922 = vunpack.c.h.b16 %v881
  %v923 = vunpack.c.l.b16 %v882
  %v924 = vunpack.c.h.b16 %v882
  %v925 = vunpack.c.l.b16 %v883
  %v926 = vunpack.c.h.b16 %v883
  %v927 = vunpack.c.l.b16 %v884
  %v928 = vunpack.c.h.b16 %v884
  %v929 = vunpack.c.l.b16 %v885
  %v930 = vunpack.c.h.b16 %v885
  %v931 = vunpack.c.l.b16 %v886
  %v932 = vunpack.c.h.b16 %v886
  %v933 = vunpack.c.l.b16 %v887
  %v934 = vunpack.c.h.b16 %v887
  %v935 = vunpack.c.l.b16 %v888
  %v936 = vunpack.c.h.b16 %v888
  %v937 = vpack.c.b16 %v905, %v905
  %v938 = vpack.c.b16 %v906, %v906
  %v939 = vpack.c.b16 %v907, %v907
  %v940 = vpack.c.b16 %v908, %v908
  %v941 = vpack.c.b16 %v909, %v909
  %v942 = vpack.c.b16 %v910, %v910
  %v943 = vpack.c.b16 %v911, %v911
  %v944 = vpack.c.b16 %v912, %v912
  %v945 = vpack.c.b16 %v913, %v913
  %v946 = vpack.c.b16 %v914, %v914
  %v947 = vpack.c.b16 %v915, %v915
  %v948 = vpack.c.b16 %v916, %v916
  %v949 = vpack.c.b16 %v917, %v917
  %v950 = vpack.c.b16 %v918, %v918
  %v951 = vpack.c.b16 %v919, %v919
  %v952 = vpack.c.b16 %v920, %v920
  %v953 = vpack.c.b16 %v921, %v921
  %v954 = vpack.c.b16 %v922, %v922
  %v955 = vpack.c.b16 %v923, %v923
  %v956 = vpack.c.b16 %v924, %v924
  %v957 = vpack.c.b16 %v925, %v925
  %v958 = vpack.c.b16 %v926, %v926
  %v959 = vpack.c.b16 %v927, %v927
  %v960 = vpack.c.b16 %v928, %v928
  %v961 = vpack.c.b16 %v929, %v929
  %v962 = vpack.c.b16 %v930, %v930
  %v963 = vpack.c.b16 %v931, %v931
  %v964 = vpack.c.b16 %v932, %v932
  %v965 = vpack.c.b16 %v933, %v933
  %v966 = vpack.c.b16 %v934, %v934
  %v967 = vpack.c.b16 %v935, %v935
  %v968 = vpack.c.b16 %v936, %v936
  %vm1001 = vcmask 781312
  %1002 = vst.msk [vmem:[%s3] sm:$0xf] %vm1001, %v937
  %1003 = vst.msk [vmem:[%s3 + $0x4] sm:$0xf] %vm1001, %v938
  %1004 = vst.msk [vmem:[%s3 + $0x8] sm:$0xf] %vm1001, %v939
  %1005 = vst.msk [vmem:[%s3 + $0xc] sm:$0xf] %vm1001, %v940
  %1006 = vst.msk [vmem:[%s3 + $0x10] sm:$0xf] %vm1001, %v941
  %1007 = vst.msk [vmem:[%s3 + $0x14] sm:$0xf] %vm1001, %v942
  %1008 = vst.msk [vmem:[%s3 + $0x18] sm:$0xf] %vm1001, %v943
  %1009 = vst.msk [vmem:[%s3 + $0x1c] sm:$0xf] %vm1001, %v944
  %1010 = vst.msk [vmem:[%s3 + $0x20] sm:$0xf] %vm1001, %v945
  %1011 = vst.msk [vmem:[%s3 + $0x24] sm:$0xf] %vm1001, %v946
  %1012 = vst.msk [vmem:[%s3 + $0x28] sm:$0xf] %vm1001, %v947
  %1013 = vst.msk [vmem:[%s3 + $0x2c] sm:$0xf] %vm1001, %v948
  %1014 = vst.msk [vmem:[%s3 + $0x30] sm:$0xf] %vm1001, %v949
  %1015 = vst.msk [vmem:[%s3 + $0x34] sm:$0xf] %vm1001, %v950
  %1016 = vst.msk [vmem:[%s3 + $0x38] sm:$0xf] %vm1001, %v951
  %1017 = vst.msk [vmem:[%s3 + $0x3c] sm:$0xf] %vm1001, %v952
  %1018 = vst.msk [vmem:[%s3 + $0x40] sm:$0xf] %vm1001, %v953
  %1019 = vst.msk [vmem:[%s3 + $0x44] sm:$0xf] %vm1001, %v954
  %1020 = vst.msk [vmem:[%s3 + $0x48] sm:$0xf] %vm1001, %v955
  %1021 = vst.msk [vmem:[%s3 + $0x4c] sm:$0xf] %vm1001, %v956
  %1022 = vst.msk [vmem:[%s3 + $0x50] sm:$0xf] %vm1001, %v957
  %1023 = vst.msk [vmem:[%s3 + $0x54] sm:$0xf] %vm1001, %v958
  %1024 = vst.msk [vmem:[%s3 + $0x58] sm:$0xf] %vm1001, %v959
  %1025 = vst.msk [vmem:[%s3 + $0x5c] sm:$0xf] %vm1001, %v960
  %1026 = vst.msk [vmem:[%s3 + $0x60] sm:$0xf] %vm1001, %v961
  %1027 = vst.msk [vmem:[%s3 + $0x64] sm:$0xf] %vm1001, %v962
  %1028 = vst.msk [vmem:[%s3 + $0x68] sm:$0xf] %vm1001, %v963
  %1029 = vst.msk [vmem:[%s3 + $0x6c] sm:$0xf] %vm1001, %v964
  %1030 = vst.msk [vmem:[%s3 + $0x70] sm:$0xf] %vm1001, %v965
  %1031 = vst.msk [vmem:[%s3 + $0x74] sm:$0xf] %vm1001, %v966
  %1032 = vst.msk [vmem:[%s3 + $0x78] sm:$0xf] %vm1001, %v967
  %1033 = vst.msk [vmem:[%s3 + $0x7c] sm:$0xf] %vm1001, %v968
  // Predicated region
  $region14: #{tpu_custom_call.1} parent=0 // pred_check
    _
  $region15: #{tpu_custom_call.1} parent=0 // pred_check_branch
    %1035 = sbr.rel (0) target = $region17
  $region16: #{tpu_custom_call.1} parent=0 // pred_region
    _
  $region17: #{tpu_custom_call.1} parent=0 // pred_fallthru
    _
  // Predicated region
  $region18: #{tpu_custom_call.1} parent=0 // pred_check
    _
  $region19: #{tpu_custom_call.1} parent=0 // pred_check_branch
    %1037 = sbr.rel (0) target = $region21
  $region20: #{tpu_custom_call.1} parent=0 // pred_region
    _
  $region21: #{tpu_custom_call.1} parent=0 // pred_fallthru
    _

</llo_original>
